<compile_context>
chip_gen: v5e
topology: v5e:2x2
jax: 0.10.0
libtpu: 0.0.40
codegen_flags: <defaults>
</compile_context>

<pallas_src>
import jax
import jax.numpy as jnp
from jax import lax
from jax.experimental import pallas as pl
from jax.experimental.pallas import tpu as pltpu


def _round_up(x, m):
    return ((x + m - 1) // m) * m


def encoder_proto_kernel(x_ref, w1_ref, b1_ref, wp_ref, bp_ref,
                         proto_ref, normh_ref, acc_ref):
    """Grid = (batch_tiles, k_tiles). K axis reduces over resSize into acc_ref."""
    k = pl.program_id(1)

    @pl.when(k == 0)
    def _():
        acc_ref[...] = jnp.zeros_like(acc_ref)

    # fc1 partial product for this K slice (bf16 x bf16 -> f32 accumulate on MXU).
    acc_ref[...] += jnp.dot(x_ref[...], w1_ref[...],
                            preferred_element_type=jnp.float32)

    @pl.when(k == pl.num_programs(1) - 1)
    def _():
        # All elementwise / reduction math in f32.
        h = acc_ref[...] + b1_ref[...]                      # [tb, h_pad] f32
        h = jnp.where(h > 0, h, 0.2 * h)                    # LeakyReLU(0.2)

        # F.normalize(dim=1, eps=1e-12):  h / max(||h||, 1e-12)
        #   == h * rsqrt(max(sum(h^2), 1e-24))   (EUP rsqrt + single vmul)
        sq = jnp.sum(h * h, axis=1, keepdims=True)          # padded cols are 0
        inv = lax.rsqrt(jnp.maximum(sq, 1e-24))
        normh_ref[...] = (h * inv).astype(normh_ref.dtype)

        # fc_p on the un-normalized hidden (cast only the MXU inputs).
        proto = jnp.dot(h.astype(wp_ref.dtype), wp_ref[...],
                        preferred_element_type=jnp.float32) + bp_ref[...]
        proto_ref[...] = proto.astype(proto_ref.dtype)


def encoder_proto_forward(x, w1, b1, wp, bp, *, tb=None, tk=None,
                          matmul_dtype=jnp.bfloat16):
    """Fused Encoder_Proto forward.

    x  : [B, resSize] f32
    w1 : [resSize, hSize]   (PyTorch fc1.weight transposed), b1: [hSize] or [1,hSize]
    wp : [hSize, protoSize] (PyTorch fc_p.weight transposed), bp: [protoSize] or [1,protoSize]
    returns (proto [B, protoSize] f32, normalized_h [B, hSize] f32)
    """
    B, res_size = x.shape
    h_size = w1.shape[1]
    proto_size = wp.shape[1]
    assert w1.shape[0] == res_size and wp.shape[0] == h_size

    # ---- tile sizes --------------------------------------------------------
    if tb is None:                       # batch tile: many grid steps for pipelining
        tb = min(256, _round_up(B, 8))
    tb = max(8, _round_up(tb, 8))
    B_pad = _round_up(B, tb)

    if tk is None:                       # K tile over resSize (bounds VMEM on v7x)
        tk = 512 if res_size >= 512 else _round_up(res_size, 128)
    tk = _round_up(tk, 128)
    res_pad = _round_up(res_size, tk)

    h_pad = _round_up(h_size, 128)       # lane-dense hidden / normalized_h
    p_pad = _round_up(proto_size, 128)   # lane-dense proto store, full MXU N

    # ---- zero-pad operands (zeros keep the math identical; sliced off below) ----
    xf = jnp.zeros((B_pad, res_pad), jnp.float32).at[:B, :res_size].set(x)
    w1f = jnp.zeros((res_pad, h_pad), jnp.float32).at[:res_size, :h_size].set(w1)
    b1f = jnp.zeros((1, h_pad), jnp.float32).at[:, :h_size].set(
        jnp.asarray(b1, jnp.float32).reshape(1, -1))
    wpf = jnp.zeros((h_pad, p_pad), jnp.float32).at[:h_size, :proto_size].set(wp)
    bpf = jnp.zeros((1, p_pad), jnp.float32).at[:, :proto_size].set(
        jnp.asarray(bp, jnp.float32).reshape(1, -1))

    # bf16 (or f32) MXU inputs; biases + all elementwise work stay f32.
    xq = xf.astype(matmul_dtype)
    w1q = w1f.astype(matmul_dtype)
    wpq = wpf.astype(matmul_dtype)

    grid = (B_pad // tb, res_pad // tk)

    flops = 2 * B_pad * (res_pad * h_pad + h_pad * p_pad)
    bytes_accessed = int(
        xq.size * xq.dtype.itemsize
        + w1q.size * w1q.dtype.itemsize
        + wpq.size * wpq.dtype.itemsize
        + (b1f.size + bpf.size) * 4
        + B_pad * p_pad * 4            # proto out
        + B_pad * h_pad * 4)           # normalized_h out
    cost = pl.CostEstimate(flops=int(flops), transcendentals=int(B_pad),
                           bytes_accessed=bytes_accessed)

    proto_p, normh_p = pl.pallas_call(
        encoder_proto_kernel,
        out_shape=(jax.ShapeDtypeStruct((B_pad, p_pad), jnp.float32),
                   jax.ShapeDtypeStruct((B_pad, h_pad), jnp.float32)),
        grid_spec=pltpu.PrefetchScalarGridSpec(
            num_scalar_prefetch=0,
            grid=grid,
            in_specs=[
                pl.BlockSpec((tb, tk), lambda i, k: (i, k)),        # x tile
                pl.BlockSpec((tk, h_pad), lambda i, k: (k, 0)),     # w1 K-slice
                pl.BlockSpec((1, h_pad), lambda i, k: (0, 0)),      # b1 (resident)
                pl.BlockSpec((h_pad, p_pad), lambda i, k: (0, 0)),  # wp (resident)
                pl.BlockSpec((1, p_pad), lambda i, k: (0, 0)),      # bp (resident)
            ],
            out_specs=[
                pl.BlockSpec((tb, p_pad), lambda i, k: (i, 0)),     # proto
                pl.BlockSpec((tb, h_pad), lambda i, k: (i, 0)),     # normalized_h
            ],
            scratch_shapes=[pltpu.VMEM((tb, h_pad), jnp.float32)],  # fc1 accumulator
        ),
        compiler_params=pltpu.CompilerParams(
            dimension_semantics=("parallel", "arbitrary"),
            vmem_limit_bytes=48 * 1024 * 1024,   # fits v7x's 64 MiB with headroom
        ),
        cost_estimate=cost,
    )(xq, w1q, b1f, wpq, bpf)

    return proto_p[:B, :proto_size], normh_p[:B, :h_size]


def reference_forward(x, w1, b1, wp, bp):
    h = x @ w1 + b1.reshape(1, -1)
    h = jnp.where(h > 0, h, 0.2 * h)
    norm = jnp.sqrt(jnp.sum(h * h, axis=1, keepdims=True))
    normalized_h = h / jnp.maximum(norm, 1e-12)
    proto = h @ wp + bp.reshape(1, -1)
    return proto, normalized_h


if __name__ == "__main__":
    # Small shapes implied by the module: feat is [batch, resSize].
    B, res_size, h_size, proto_size = 8, 32, 64, 16

    key = jax.random.PRNGKey(0)
    k_x, k_w1, k_wp = jax.random.split(key, 3)

    x = jax.random.normal(k_x, (B, res_size), dtype=jnp.float32)

    # weights_init: Linear weights ~ N(0, 0.02), biases = 0.
    w1 = 0.02 * jax.random.normal(k_w1, (res_size, h_size), dtype=jnp.float32)
    b1 = jnp.zeros((1, h_size), dtype=jnp.float32)
    wp = 0.02 * jax.random.normal(k_wp, (h_size, proto_size), dtype=jnp.float32)
    bp = jnp.zeros((1, proto_size), dtype=jnp.float32)

    proto_ref_, norm_h_ref_ = reference_forward(x, w1, b1, wp, bp)

    # 1) exact-semantics check (f32 MXU inputs) -> tight tolerance.
    proto32, norm32 = encoder_proto_forward(x, w1, b1, wp, bp,
                                            matmul_dtype=jnp.float32)
    proto32 = jax.block_until_ready(proto32)
    norm32 = jax.block_until_ready(norm32)
    assert jnp.allclose(proto32, proto_ref_, atol=1e-5, rtol=1e-5)
    assert jnp.allclose(norm32, norm_h_ref_, atol=1e-5, rtol=1e-5)

    # 2) fast path (bf16 MXU inputs, f32 accumulation) -> bf16-level tolerance.
    proto, norm_h = encoder_proto_forward(x, w1, b1, wp, bp)
    proto = jax.block_until_ready(proto)
    norm_h = jax.block_until_ready(norm_h)
    assert jnp.allclose(proto, proto_ref_, atol=1e-2, rtol=5e-2)
    assert jnp.allclose(norm_h, norm_h_ref_, atol=1e-2, rtol=5e-2)

    print("KERNEL_OK")
</pallas_src>

<mosaic_0001>
module attributes {stable_mosaic.version = 11 : i64} {
  func.func @encoder_proto_kernel(%arg0: i32, %arg1: i32, %arg2: memref<8x128xf32, #tpu.memory_space<vmem>>, %arg3: memref<128x128xf32, #tpu.memory_space<vmem>>, %arg4: memref<1x128xf32, #tpu.memory_space<vmem>>, %arg5: memref<128x128xf32, #tpu.memory_space<vmem>>, %arg6: memref<1x128xf32, #tpu.memory_space<vmem>>, %arg7: memref<8x128xf32, #tpu.memory_space<vmem>>, %arg8: memref<8x128xf32, #tpu.memory_space<vmem>>, %arg9: memref<8x128xf32, #tpu.memory_space<vmem>>) attributes {dimension_semantics = [#tpu.dimension_semantics<parallel>, #tpu.dimension_semantics<arbitrary>], iteration_bounds = array<i64: 1, 1>, scalar_prefetch = 0 : i64, scratch_operands = 1 : i64, tpu.core_type = #tpu.core_type<tc>, window_params = [{transform_indices = @transform_0, window_bounds = array<i64: 8, 128>}, {transform_indices = @transform_1, window_bounds = array<i64: 128, 128>}, {pipeline_mode = #tpu.pipeline_mode<synchronous>, transform_indices = @transform_2, window_bounds = array<i64: 1, 128>}, {pipeline_mode = #tpu.pipeline_mode<synchronous>, transform_indices = @transform_3, window_bounds = array<i64: 128, 128>}, {pipeline_mode = #tpu.pipeline_mode<synchronous>, transform_indices = @transform_4, window_bounds = array<i64: 1, 128>}, {transform_indices = @transform_5, window_bounds = array<i64: 8, 128>}, {transform_indices = @transform_6, window_bounds = array<i64: 8, 128>}]} {
    %c0_i32 = arith.constant 0 : i32
    %0 = arith.cmpi eq, %arg1, %c0_i32 : i32
    %1 = arith.extui %0 : i1 to i32
    %c0_i32_0 = arith.constant 0 : i32
    %2 = arith.cmpi ne, %1, %c0_i32_0 : i32
    scf.if %2 {
      %cst_10 = arith.constant 0.000000e+00 : f32
      %12 = vector.broadcast %cst_10 : f32 to vector<8x128xf32>
      %c0_11 = arith.constant 0 : index
      %c0_12 = arith.constant 0 : index
      %13 = vector.load %arg9[%c0_11, %c0_12] : memref<8x128xf32, #tpu.memory_space<vmem>>, vector<8x128xf32>
      tpu.vector_store %arg9[%c0_11, %c0_12], %12 {strides = array<i32>} : memref<8x128xf32, #tpu.memory_space<vmem>>, vector<8x128xf32>,
    } else {
    }
    %c0 = arith.constant 0 : index
    %c0_1 = arith.constant 0 : index
    %3 = vector.load %arg9[%c0, %c0_1] : memref<8x128xf32, #tpu.memory_space<vmem>>, vector<8x128xf32>
    %c0_2 = arith.constant 0 : index
    %c0_3 = arith.constant 0 : index
    %4 = vector.load %arg2[%c0_2, %c0_3] : memref<8x128xf32, #tpu.memory_space<vmem>>, vector<8x128xf32>
    %c0_4 = arith.constant 0 : index
    %c0_5 = arith.constant 0 : index
    %5 = vector.load %arg3[%c0_4, %c0_5] : memref<128x128xf32, #tpu.memory_space<vmem>>, vector<128x128xf32>
    %cst = arith.constant dense<0.000000e+00> : vector<8x128xf32>
    %6 = tpu.matmul %4, %5, %cst {dimension_numbers = #tpu.dot_dimension_numbers<[1], [0], [0], [1], [0, 0, 1, 1], [], []>} : vector<8x128xf32>, vector<128x128xf32>, vector<8x128xf32> -> vector<8x128xf32>
    %7 = arith.addf %3, %6 : vector<8x128xf32>
    %c0_6 = arith.constant 0 : index
    %c0_7 = arith.constant 0 : index
    %8 = vector.load %arg9[%c0_6, %c0_7] : memref<8x128xf32, #tpu.memory_space<vmem>>, vector<8x128xf32>
    tpu.vector_store %arg9[%c0_6, %c0_7], %7 {strides = array<i32>} : memref<8x128xf32, #tpu.memory_space<vmem>>, vector<8x128xf32>,
    %c0_i32_8 = arith.constant 0 : i32
    %9 = arith.cmpi eq, %arg1, %c0_i32_8 : i32
    %10 = arith.extui %9 : i1 to i32
    %c0_i32_9 = arith.constant 0 : i32
    %11 = arith.cmpi ne, %10, %c0_i32_9 : i32
    scf.if %11 {
      %c0_10 = arith.constant 0 : index
      %c0_11 = arith.constant 0 : index
      %12 = vector.load %arg9[%c0_10, %c0_11] : memref<8x128xf32, #tpu.memory_space<vmem>>, vector<8x128xf32>
      %c0_12 = arith.constant 0 : index
      %c0_13 = arith.constant 0 : index
      %13 = vector.load %arg4[%c0_12, %c0_13] : memref<1x128xf32, #tpu.memory_space<vmem>>, vector<1x128xf32>
      %14 = vector.broadcast %13 : vector<1x128xf32> to vector<8x128xf32>
      %15 = arith.addf %12, %14 : vector<8x128xf32>
      %cst_14 = arith.constant 0.000000e+00 : f32
      %16 = vector.broadcast %cst_14 : f32 to vector<8x128xf32>
      %17 = arith.cmpf ogt, %15, %16 : vector<8x128xf32>
      %cst_15 = arith.constant 2.000000e-01 : f32
      %18 = vector.broadcast %cst_15 : f32 to vector<8x128xf32>
      %19 = arith.mulf %18, %15 : vector<8x128xf32>
      %20 = arith.select %17, %15, %19 : vector<8x128xi1>, vector<8x128xf32>
      %21 = arith.mulf %20, %20 : vector<8x128xf32>
      %cst_16 = arith.constant dense<0.000000e+00> : vector<8xf32>
      %22 = vector.multi_reduction <add>, %21, %cst_16 [1] : vector<8x128xf32> to vector<8xf32>
      %23 = vector.shape_cast %22 : vector<8xf32> to vector<8x1xf32>
      %cst_17 = arith.constant 1.000000e-24 : f32
      %24 = vector.broadcast %cst_17 : f32 to vector<8x1xf32>
      %25 = arith.maximumf %23, %24 : vector<8x1xf32>
      %26 = math.rsqrt %25 : vector<8x1xf32>
      %27 = vector.broadcast %26 : vector<8x1xf32> to vector<8x128xf32>
      %28 = arith.mulf %20, %27 : vector<8x128xf32>
      %c0_18 = arith.constant 0 : index
      %c0_19 = arith.constant 0 : index
      %29 = vector.load %arg8[%c0_18, %c0_19] : memref<8x128xf32, #tpu.memory_space<vmem>>, vector<8x128xf32>
      tpu.vector_store %arg8[%c0_18, %c0_19], %28 {strides = array<i32>} : memref<8x128xf32, #tpu.memory_space<vmem>>, vector<8x128xf32>,
      %c0_20 = arith.constant 0 : index
      %c0_21 = arith.constant 0 : index
      %30 = vector.load %arg5[%c0_20, %c0_21] : memref<128x128xf32, #tpu.memory_space<vmem>>, vector<128x128xf32>
      %cst_22 = arith.constant dense<0.000000e+00> : vector<8x128xf32>
      %31 = tpu.matmul %20, %30, %cst_22 {dimension_numbers = #tpu.dot_dimension_numbers<[1], [0], [0], [1], [0, 0, 1, 1], [], []>} : vector<8x128xf32>, vector<128x128xf32>, vector<8x128xf32> -> vector<8x128xf32>
      %c0_23 = arith.constant 0 : index
      %c0_24 = arith.constant 0 : index
      %32 = vector.load %arg6[%c0_23, %c0_24] : memref<1x128xf32, #tpu.memory_space<vmem>>, vector<1x128xf32>
      %33 = vector.broadcast %32 : vector<1x128xf32> to vector<8x128xf32>
      %34 = arith.addf %31, %33 : vector<8x128xf32>
      %c0_25 = arith.constant 0 : index
      %c0_26 = arith.constant 0 : index
      %35 = vector.load %arg7[%c0_25, %c0_26] : memref<8x128xf32, #tpu.memory_space<vmem>>, vector<8x128xf32>
      tpu.vector_store %arg7[%c0_25, %c0_26], %34 {strides = array<i32>} : memref<8x128xf32, #tpu.memory_space<vmem>>, vector<8x128xf32>,
    } else {
    }
    return
  }
  func.func @transform_0(%arg0: i32, %arg1: i32) -> (i32, i32) {
    %c0_i32 = arith.constant 0 : i32
    return %arg0, %arg1 : i32, i32
  }
  func.func @transform_1(%arg0: i32, %arg1: i32) -> (i32, i32) {
    %c0_i32 = arith.constant 0 : i32
    %c0_i32_0 = arith.constant 0 : i32
    return %arg1, %c0_i32 : i32, i32
  }
  func.func @transform_2(%arg0: i32, %arg1: i32) -> (i32, i32) {
    %c0_i32 = arith.constant 0 : i32
    %c0_i32_0 = arith.constant 0 : i32
    %c0_i32_1 = arith.constant 0 : i32
    return %c0_i32, %c0_i32_0 : i32, i32
  }
  func.func @transform_3(%arg0: i32, %arg1: i32) -> (i32, i32) {
    %c0_i32 = arith.constant 0 : i32
    %c0_i32_0 = arith.constant 0 : i32
    %c0_i32_1 = arith.constant 0 : i32
    return %c0_i32, %c0_i32_0 : i32, i32
  }
  func.func @transform_4(%arg0: i32, %arg1: i32) -> (i32, i32) {
    %c0_i32 = arith.constant 0 : i32
    %c0_i32_0 = arith.constant 0 : i32
    %c0_i32_1 = arith.constant 0 : i32
    return %c0_i32, %c0_i32_0 : i32, i32
  }
  func.func @transform_5(%arg0: i32, %arg1: i32) -> (i32, i32) {
    %c0_i32 = arith.constant 0 : i32
    %c0_i32_0 = arith.constant 0 : i32
    return %arg0, %c0_i32 : i32, i32
  }
  func.func @transform_6(%arg0: i32, %arg1: i32) -> (i32, i32) {
    %c0_i32 = arith.constant 0 : i32
    %c0_i32_0 = arith.constant 0 : i32
    return %arg0, %c0_i32 : i32, i32
  }
}

</mosaic_0001>

<llo_original>
// kernel: tpu_custom_call.1
$region0: #{tpu_custom_call.1}
  #allocation0 [shape = 'u32[]', space=smem, size = 0x4, offset = 0x4, fixed_abs, tag = 'smem constant byte address 0x4 - core index']
  #allocation1 [shape = 'u32[72,128]{1,0:T(1,128)}', space=vmem, size = 0x9000, scoped, tag = 'internal scratch']
  #allocation2 [shape = 'f32[8,128]{1,0:T(8,128)}', space=vmem, size = 0x1000, scoped, tag = 'scratch operand']
  %s0 = inlined_call_operand.hbm [shape: f32[8,128], index: 0, kind: input, shape index: {}]
  %s1 = inlined_call_operand.hbm [shape: f32[128,128], index: 1, kind: input, shape index: {}]
  %s2 = inlined_call_operand.vmem [shape: f32[1,128], index: 2, kind: input, shape index: {}]
  %s3 = inlined_call_operand.hbm [shape: f32[128,128], index: 3, kind: input, shape index: {}]
  %s4 = inlined_call_operand.vmem [shape: f32[1,128], index: 4, kind: input, shape index: {}]
  %s5 = inlined_call_operand.hbm [shape: f32[8,128], index: 5, kind: output, shape index: {0}]
  %s6 = inlined_call_operand.hbm [shape: f32[8,128], index: 6, kind: output, shape index: {1}]
  %7 = xla_tuple %s5, %s6
  %s8 = sld [smem:[#allocation0]]
  $region58: #{tpu_custom_call.1} parent=0
    _
  %s10 = ssub.s32 1, %s8
  %s11 = scalar_select 0, %s10, %s8
  $region1: #{tpu_custom_call.1} parent=0
    #allocation3 [shape = 'u8[4096]{0}', space=vmem, size = 0x1000, scoped, tag = 'input window, operand 0, single buffered']
    #allocation4 [shape = 's32[1]{0}', space=sflag, size = 0x4, scoped, tag = 'scoped memory for tpu_custom_call.1']
    #allocation5 [shape = 's32[1]{0}', space=sflag, size = 0x4, scoped, tag = 'scoped memory for tpu_custom_call.1']
    #allocation6 [shape = 'u8[65536]{0}', space=vmem, size = 0x10000, scoped, tag = 'input window, operand 1, single buffered']
    #allocation7 [shape = 's32[1]{0}', space=sflag, size = 0x4, scoped, tag = 'scoped memory for tpu_custom_call.1']
    #allocation8 [shape = 'u8[65536]{0}', space=vmem, size = 0x10000, scoped, tag = 'input window, operand 3, single buffered']
    #allocation9 [shape = 'u8[4096]{0}', space=vmem, size = 0x1000, scoped, tag = 'output window, operand 0, single buffered']
    #allocation10 [shape = 'u8[4096]{0}', space=vmem, size = 0x1000, scoped, tag = 'output window, operand 1, single buffered']
    #allocation11 [shape = 's32[1]{0}', space=sflag, size = 0x4, scoped, tag = 'scoped memory for tpu_custom_call.1']
    %12 = vsyncpa [#allocation4], 0
    %13 = vsyncpa [#allocation7], 0
    %14 = vsyncpa [#allocation5], 0
    %15 = vsyncpa [#allocation11], 0
    // Predicated region
    $region2: #{tpu_custom_call.1} parent=1 // pred_check
      _
    $region3: #{tpu_custom_call.1} parent=1 // pred_check_branch
      %17 = sbr.rel (0) target = $region5
    $region4: #{tpu_custom_call.1} parent=1 // pred_region
      %19 = vsyncadd [#allocation4], 0
      %s21 = sshll.u32 %s0, 4
      %s22 = int_to_ptr.hbm [resolvable:$true] %s21
      %s23 = sshll.u32 [#allocation3], 4
      %s24 = int_to_ptr.vmem [resolvable:$true] %s23
      %26 = dma.hbm_to_vmem [thread:$0]  %s22, 128, %s24, [#allocation4]
    $region5: #{tpu_custom_call.1} parent=1 // pred_fallthru
      _
    // Predicated region
    $region6: #{tpu_custom_call.1} parent=1 // pred_check
      _
    $region7: #{tpu_custom_call.1} parent=1 // pred_check_branch
      %28 = sbr.rel (0) target = $region9
    $region8: #{tpu_custom_call.1} parent=1 // pred_region
      %30 = vsyncadd [#allocation7], 0
      %s31 = sshll.u32 %s1, 4
      %s32 = int_to_ptr.hbm [resolvable:$true] %s31
      %s33 = sshll.u32 [#allocation6], 4
      %s34 = int_to_ptr.vmem [resolvable:$true] %s33
      %39 = dma.hbm_to_vmem [thread:$0]  %s32, 2048, %s34, [#allocation7], 128, 128, 8
    $region9: #{tpu_custom_call.1} parent=1 // pred_fallthru
      _
    // Predicated region
    $region10: #{tpu_custom_call.1} parent=1 // pred_check
      _
    $region11: #{tpu_custom_call.1} parent=1 // pred_check_branch
      %41 = sbr.rel (0) target = $region13
    $region12: #{tpu_custom_call.1} parent=1 // pred_region
      _
    $region13: #{tpu_custom_call.1} parent=1 // pred_fallthru
      _
    // Predicated region
    $region14: #{tpu_custom_call.1} parent=1 // pred_check
      _
    $region15: #{tpu_custom_call.1} parent=1 // pred_check_branch
      %43 = sbr.rel (0) target = $region17
    $region16: #{tpu_custom_call.1} parent=1 // pred_region
      %45 = vsyncadd [#allocation7], 0
      %s46 = sshll.u32 %s3, 4
      %s47 = int_to_ptr.hbm [resolvable:$true] %s46
      %s48 = sshll.u32 [#allocation8], 4
      %s49 = int_to_ptr.vmem [resolvable:$true] %s48
      %54 = dma.hbm_to_vmem [thread:$0]  %s47, 2048, %s49, [#allocation7], 128, 128, 8
    $region17: #{tpu_custom_call.1} parent=1 // pred_fallthru
      _
    // Predicated region
    $region18: #{tpu_custom_call.1} parent=1 // pred_check
      _
    $region19: #{tpu_custom_call.1} parent=1 // pred_check_branch
      %56 = sbr.rel (0) target = $region21
    $region20: #{tpu_custom_call.1} parent=1 // pred_region
      _
    $region21: #{tpu_custom_call.1} parent=1 // pred_fallthru
      _
    // Predicated region
    $region22: #{tpu_custom_call.1} parent=1 // pred_check
      _
    $region23: #{tpu_custom_call.1} parent=1 // pred_check_branch
      %58 = sbr.rel (0) target = $region25
    $region24: #{tpu_custom_call.1} parent=1 // pred_region
      %60 = dma.done [#allocation4], 128
    $region25: #{tpu_custom_call.1} parent=1 // pred_fallthru
      _
    // Predicated region
    $region26: #{tpu_custom_call.1} parent=1 // pred_check
      _
    $region27: #{tpu_custom_call.1} parent=1 // pred_check_branch
      %62 = sbr.rel (0) target = $region29
    $region28: #{tpu_custom_call.1} parent=1 // pred_region
      %64 = dma.done [#allocation7], 2048
    $region29: #{tpu_custom_call.1} parent=1 // pred_fallthru
      _
    // Predicated region
    $region30: #{tpu_custom_call.1} parent=1 // pred_check
      _
    $region31: #{tpu_custom_call.1} parent=1 // pred_check_branch
      %66 = sbr.rel (0) target = $region33
    $region32: #{tpu_custom_call.1} parent=1 // pred_region
      %68 = dma.done [#allocation7], 2048
    $region33: #{tpu_custom_call.1} parent=1 // pred_fallthru
      _
    %p69 = scmp.eq.s32.totalorder 0, 0
    // Predicated region
    $region34: #{tpu_custom_call.1} parent=1 // pred_check
      %p70 = pneg %p69
    $region35: #{tpu_custom_call.1} parent=1 // pred_check_branch
      %72 = sbr.rel (%p70) target = $region37
    $region36: #{tpu_custom_call.1} parent=1 // pred_region
      %73 = vst [vmem:[#allocation2] sm:$0xff] 0.0
    $region37: #{tpu_custom_call.1} parent=1 // pred_fallthru
      _
    %v74 = vld [vmem:[#allocation2] sm:$0xff]
    %v75 = vld [vmem:[#allocation3] sm:$0xff]
    %v76 = vld [vmem:[#allocation6] sm:$0xff]
    %v77 = vld [vmem:[#allocation6 + $0x8] sm:$0xff]
    %v78 = vld [vmem:[#allocation6 + $0x10] sm:$0xff]
    %v79 = vld [vmem:[#allocation6 + $0x18] sm:$0xff]
    %v80 = vld [vmem:[#allocation6 + $0x20] sm:$0xff]
    %v81 = vld [vmem:[#allocation6 + $0x28] sm:$0xff]
    %v82 = vld [vmem:[#allocation6 + $0x30] sm:$0xff]
    %v83 = vld [vmem:[#allocation6 + $0x38] sm:$0xff]
    %v84 = vld [vmem:[#allocation6 + $0x40] sm:$0xff]
    %v85 = vld [vmem:[#allocation6 + $0x48] sm:$0xff]
    %v86 = vld [vmem:[#allocation6 + $0x50] sm:$0xff]
    %v87 = vld [vmem:[#allocation6 + $0x58] sm:$0xff]
    %v88 = vld [vmem:[#allocation6 + $0x60] sm:$0xff]
    %v89 = vld [vmem:[#allocation6 + $0x68] sm:$0xff]
    %v90 = vld [vmem:[#allocation6 + $0x70] sm:$0xff]
    %v91 = vld [vmem:[#allocation6 + $0x78] sm:$0xff]
    %92 = vmatpush.msra.mxu0 %v91
    %93 = vmatpush.msra.mxu0 %v90
    %94 = vmatpush.msra.mxu0 %v89
    %95 = vmatpush.msra.mxu0 %v88
    %96 = vmatpush.msra.mxu0 %v87
    %97 = vmatpush.msra.mxu0 %v86
    %98 = vmatpush.msra.mxu0 %v85
    %99 = vmatpush.msra.mxu0 %v84
    %100 = vmatpush.msra.mxu0 %v83
    %101 = vmatpush.msra.mxu0 %v82
    %102 = vmatpush.msra.mxu0 %v81
    %103 = vmatpush.msra.mxu0 %v80
    %104 = vmatpush.msra.mxu0 %v79
    %105 = vmatpush.msra.mxu0 %v78
    %106 = vmatpush.msra.mxu0 %v77
    %107 = vmatpush.msra.mxu0 %v76
    %108 = vmatmul.f32.gmra.mxu0 %v75
    %v109 = vpop.f32.mrf.mxu0
    %v110 = vadd.f32 0.0, %v109
    %111 = vdwg.mxu0
    %v112 = vadd.f32 %v74, %v110
    %113 = vst [vmem:[#allocation2] sm:$0xff] %v112
    // Predicated region
    $region38: #{tpu_custom_call.1} parent=1 // pred_check
      %p114 = pneg %p69
    $region39: #{tpu_custom_call.1} parent=1 // pred_check_branch
      %116 = sbr.rel (%p114) target = $region41
    $region40: #{tpu_custom_call.1} parent=1 // pred_region
      %v117 = vld [vmem:[#allocation2] sm:$0xff]
      %v118 = vld [vmem:[%s2] sm:$0x1]
      %v120 = vperm.slane %v118, 0
      %v122 = vadd.f32 %v117, %v120
      %vm123 = vcmp.gt.f32.partialorder %v122, 0.0
      %v124 = vmul.f32 %v122, 0.2
      %v125 = vsel %vm123, %v122, %v124
      %v126 = vmul.f32 %v125, %v125
      %127 = vadd.xlane.f32.xlu0 %v126
      %v128 = vpop.xlane.xlu0 %127
      %v129 = vmax.f32 %v128, 1e-24
      %v130 = vrsqrt.pop %v129
      %v131 = vmul.f32 %v130, %v129
      %v132 = vmul.f32 %v131, %v130
      %v133 = vmul.f32 0.5, %v132
      %v134 = vsub.f32 1.5, %v133
      %v135 = vmul.f32 %v130, %v134
      %vm136 = vweird.f32 %v129
      %vm137 = vweird.f32 %v130
      %vm138 = vmor %vm136, %vm137
      %v139 = vsel %vm138, %v130, %v135
      %v140 = vmul.f32 %v125, %v139
      %141 = vst [vmem:[#allocation10] sm:$0xff] %v140
      %v142 = vld [vmem:[#allocation8] sm:$0xff]
      %v143 = vld [vmem:[#allocation8 + $0x8] sm:$0xff]
      %v144 = vld [vmem:[#allocation8 + $0x10] sm:$0xff]
      %v145 = vld [vmem:[#allocation8 + $0x18] sm:$0xff]
      %v146 = vld [vmem:[#allocation8 + $0x20] sm:$0xff]
      %v147 = vld [vmem:[#allocation8 + $0x28] sm:$0xff]
      %v148 = vld [vmem:[#allocation8 + $0x30] sm:$0xff]
      %v149 = vld [vmem:[#allocation8 + $0x38] sm:$0xff]
      %v150 = vld [vmem:[#allocation8 + $0x40] sm:$0xff]
      %v151 = vld [vmem:[#allocation8 + $0x48] sm:$0xff]
      %v152 = vld [vmem:[#allocation8 + $0x50] sm:$0xff]
      %v153 = vld [vmem:[#allocation8 + $0x58] sm:$0xff]
      %v154 = vld [vmem:[#allocation8 + $0x60] sm:$0xff]
      %v155 = vld [vmem:[#allocation8 + $0x68] sm:$0xff]
      %v156 = vld [vmem:[#allocation8 + $0x70] sm:$0xff]
      %v157 = vld [vmem:[#allocation8 + $0x78] sm:$0xff]
      %v158 = vld [vmem:[%s4] sm:$0x1]
      %v160 = vperm.slane %v158, 0
      %162 = vmatpush.msra.mxu0 %v157
      %163 = vmatpush.msra.mxu0 %v156
      %164 = vmatpush.msra.mxu0 %v155
      %165 = vmatpush.msra.mxu0 %v154
      %166 = vmatpush.msra.mxu0 %v153
      %167 = vmatpush.msra.mxu0 %v152
      %168 = vmatpush.msra.mxu0 %v151
      %169 = vmatpush.msra.mxu0 %v150
      %170 = vmatpush.msra.mxu0 %v149
      %171 = vmatpush.msra.mxu0 %v148
      %172 = vmatpush.msra.mxu0 %v147
      %173 = vmatpush.msra.mxu0 %v146
      %174 = vmatpush.msra.mxu0 %v145
      %175 = vmatpush.msra.mxu0 %v144
      %176 = vmatpush.msra.mxu0 %v143
      %177 = vmatpush.msra.mxu0 %v142
      %178 = vmatmul.f32.gmra.mxu0 %v125
      %v179 = vpop.f32.mrf.mxu0
      %v180 = vadd.f32 %v160, %v179
      %181 = vdwg.mxu0
      %182 = vst [vmem:[#allocation9] sm:$0xff] %v180
    $region41: #{tpu_custom_call.1} parent=1 // pred_fallthru
      _
    // Predicated region
    $region42: #{tpu_custom_call.1} parent=1 // pred_check
      _
    $region43: #{tpu_custom_call.1} parent=1 // pred_check_branch
      %184 = sbr.rel (0) target = $region45
    $region44: #{tpu_custom_call.1} parent=1 // pred_region
      %186 = vsyncadd [#allocation5], 0
      %s188 = sshll.u32 [#allocation9], 4
      %s189 = int_to_ptr.vmem [resolvable:$true] %s188
      %s190 = sshll.u32 %s5, 4
      %s191 = int_to_ptr.hbm [resolvable:$true] %s190
      %193 = dma.vmem_to_hbm [thread:$0]  %s189, 128, %s191, [#allocation5]
    $region45: #{tpu_custom_call.1} parent=1 // pred_fallthru
      _
    // Predicated region
    $region46: #{tpu_custom_call.1} parent=1 // pred_check
      _
    $region47: #{tpu_custom_call.1} parent=1 // pred_check_branch
      %195 = sbr.rel (0) target = $region49
    $region48: #{tpu_custom_call.1} parent=1 // pred_region
      %197 = vsyncadd [#allocation11], 0
      %s199 = sshll.u32 [#allocation10], 4
      %s200 = int_to_ptr.vmem [resolvable:$true] %s199
      %s201 = sshll.u32 %s6, 4
      %s202 = int_to_ptr.hbm [resolvable:$true] %s201
      %204 = dma.vmem_to_hbm [thread:$0]  %s200, 128, %s202, [#allocation11]
    $region49: #{tpu_custom_call.1} parent=1 // pred_fallthru
      _
    // Predicated region
    $region50: #{tpu_custom_call.1} parent=1 // pred_check
      _
    $region51: #{tpu_custom_call.1} parent=1 // pred_check_branch
      %206 = sbr.rel (0) target = $region53
    $region52: #{tpu_custom_call.1} parent=1 // pred_region
      %208 = dma.done [#allocation5], 128
    $region53: #{tpu_custom_call.1} parent=1 // pred_fallthru
      _
    // Predicated region
    $region54: #{tpu_custom_call.1} parent=1 // pred_check
      _
    $region55: #{tpu_custom_call.1} parent=1 // pred_check_branch
      %210 = sbr.rel (0) target = $region57
    $region56: #{tpu_custom_call.1} parent=1 // pred_region
      %212 = dma.done [#allocation11], 128
    $region57: #{tpu_custom_call.1} parent=1 // pred_fallthru
      _
    %213 = vsyncpa [#allocation4], 1
    %214 = vsyncpa [#allocation7], 1
    %215 = vsyncpa [#allocation5], 1
    %216 = vsyncpa [#allocation11], 1

</llo_original>
